<compile_context>
chip_gen: v6e
topology: v6e:2x2x1
jax: 0.10.0
libtpu: 0.0.40
codegen_flags: <defaults>
</compile_context>

<pallas_src>
import functools

import jax
import jax.numpy as jnp
from jax import lax
from jax.experimental import pallas as pl
from jax.experimental.pallas import tpu as pltpu

BN_EPS = 1e-3

# Tap order inside the 3x3 window: the 4 max-pool taps (never padded when H,W
# are even) come first, the 5 conv-only taps after.  (r, c) offsets.
_TAPS = ((1, 1), (1, 2), (2, 1), (2, 2),
         (0, 0), (0, 1), (0, 2), (1, 0), (2, 0))


def _conv_pool_stats_kernel(p_ref, w_ref, b_ref, y_ref, stats_ref, *,
                            cin, cout, m_true, tile_m):
    """Phase 1: conv(matmul) + max-pool + per-channel partial BN statistics.

    p_ref    : (9*cin, tile_m)     bf16 im2col patches (tap-major, chan-minor)
    w_ref    : (cout, 9*cin)       bf16 conv weight
    b_ref    : (cout, 1)           f32 conv bias
    y_ref    : (cout+cin, tile_m)  f32 un-normalized concat(conv, pool)
    stats_ref: (cout+cin, 2)       f32 resident accumulator [:,0]=sum [:,1]=sumsq
    """
    i = pl.program_id(0)

    @pl.when(i == 0)
    def _():
        stats_ref[...] = jnp.zeros_like(stats_ref)

    p = p_ref[...]                                            # (9*cin, tile_m) bf16

    # 3x3 / stride-2 conv == one MXU matmul over the patch tile (+ f32 bias).
    conv = jnp.dot(w_ref[...], p, preferred_element_type=jnp.float32)
    conv = conv + b_ref[...]                                  # (cout, tile_m) f32

    # 2x2 / stride-2 max-pool = max over the first four taps of the patches.
    pool = jnp.maximum(
        jnp.maximum(p[0:cin, :], p[cin:2 * cin, :]),
        jnp.maximum(p[2 * cin:3 * cin, :], p[3 * cin:4 * cin, :]),
    ).astype(jnp.float32)                                     # (cin, tile_m)

    # Write conv / pool to disjoint channel slices (no in-kernel concat);
    # full-lane (tile_m-wide) stores -> lane-dense.
    y_ref[0:cout, :] = conv
    y_ref[cout:, :] = pool

    # Per-channel partial sums over *valid* pixels only (mask the M padding).
    col = i * tile_m + lax.broadcasted_iota(jnp.int32, (1, tile_m), 1)
    valid = (col < m_true).astype(jnp.float32)                # (1, tile_m)
    conv_m = conv * valid
    pool_m = pool * valid
    stats_ref[0:cout, 0:1] += jnp.sum(conv_m, axis=1, keepdims=True)
    stats_ref[0:cout, 1:2] += jnp.sum(conv_m * conv_m, axis=1, keepdims=True)
    stats_ref[cout:, 0:1] += jnp.sum(pool_m, axis=1, keepdims=True)
    stats_ref[cout:, 1:2] += jnp.sum(pool_m * pool_m, axis=1, keepdims=True)


def _bn_relu_kernel(y_ref, scale_ref, shift_ref, o_ref):
    """Phase 2: out = relu(y * scale + shift), scale/shift fold the BN affine."""
    o_ref[...] = jnp.maximum(y_ref[...] * scale_ref[...] + shift_ref[...], 0.0)


def _round_up(a, b):
    return (a + b - 1) // b * b


def downsampler_block(x_nchw, conv_w, conv_b, gamma, beta, *, tile_m_max=1024):
    """Forward pass of DownsamplerBlock. Input/output are NCHW like PyTorch."""
    N, Cin, H, W = x_nchw.shape
    Cout = conv_w.shape[0]
    nout = Cout + Cin
    assert H % 2 == 0 and W % 2 == 0, "even spatial dims assumed (conv & pool agree)"
    Ho, Wo = H // 2, W // 2
    M = N * Ho * Wo

    tile_m = min(tile_m_max, _round_up(M, 128))   # lane-granular, 128..1024
    Mp = _round_up(M, tile_m)
    nt = Mp // tile_m

    # ---- glue: NCHW -> padded NHWC -> transposed im2col (9*Cin, Mp) in bf16 --
    # TODO(synk): build the 9 taps in-kernel from overlapping row strips of the
    # padded input (manual DMA) to remove the 9x im2col HBM intermediate; bf16
    # patches are the sanctioned interim step that already halves the DMA bytes.
    x = jnp.transpose(x_nchw, (0, 2, 3, 1)).astype(jnp.float32)         # NHWC
    xp = jnp.pad(x, ((0, 0), (1, 1), (1, 1), (0, 0)))                   # pad=1
    taps = [xp[:, r:r + 2 * Ho:2, c:c + 2 * Wo:2, :] for (r, c) in _TAPS]
    patches = jnp.stack(taps, axis=0)                                   # (9,N,Ho,Wo,Cin)
    patches = jnp.transpose(patches, (0, 4, 1, 2, 3)).reshape(9 * Cin, M)
    patches = jnp.pad(patches, ((0, 0), (0, Mp - M))).astype(jnp.bfloat16)

    # conv weight (Cout, Cin, 3, 3) -> (Cout, 9*Cin) in the same tap order.
    w_t = jnp.stack([conv_w[:, :, r, c] for (r, c) in _TAPS], axis=1)
    w_t = w_t.reshape(Cout, 9 * Cin).astype(jnp.bfloat16)
    b_t = conv_b.reshape(Cout, 1).astype(jnp.float32)

    # ---- phase 1: conv + pool + partial BN stats (pipelined over M tiles) ----
    flops_a = 2 * Mp * (9 * Cin) * Cout
    bytes_a = (patches.size * 2 + w_t.size * 2 + b_t.size * 4
               + nout * Mp * 4 + nout * 2 * 4)
    y, stats = pl.pallas_call(
        functools.partial(_conv_pool_stats_kernel,
                          cin=Cin, cout=Cout, m_true=M, tile_m=tile_m),
        grid=(nt,),
        in_specs=[
            pl.BlockSpec((9 * Cin, tile_m), lambda i: (0, i)),
            pl.BlockSpec((Cout, 9 * Cin), lambda i: (0, 0)),
            pl.BlockSpec((Cout, 1), lambda i: (0, 0)),
        ],
        out_specs=(
            pl.BlockSpec((nout, tile_m), lambda i: (0, i)),
            pl.BlockSpec((nout, 2), lambda i: (0, 0)),      # resident accumulator
        ),
        out_shape=(
            jax.ShapeDtypeStruct((nout, Mp), jnp.float32),
            jax.ShapeDtypeStruct((nout, 2), jnp.float32),
        ),
        # stats accumulate across the M axis -> must be "arbitrary".
        compiler_params=pltpu.CompilerParams(dimension_semantics=("arbitrary",)),
        cost_estimate=pl.CostEstimate(flops=flops_a, transcendentals=0,
                                      bytes_accessed=bytes_a),
    )(patches, w_t, b_t)

    # ---- tiny BN math in plain JAX (nout channels) ---------------------------
    mean = stats[:, 0] / M
    var = jnp.maximum(stats[:, 1] / M - mean * mean, 0.0)   # biased (training) var
    inv_std = lax.rsqrt(var + BN_EPS)
    g = gamma.astype(jnp.float32)
    scale = (g * inv_std).reshape(nout, 1)
    shift = (beta.astype(jnp.float32) - mean * g * inv_std).reshape(nout, 1)

    # ---- phase 2: normalize + ReLU (fully parallel over M tiles) -------------
    bytes_b = 2 * nout * Mp * 4 + 2 * nout * 4
    out_t = pl.pallas_call(
        _bn_relu_kernel,
        grid=(nt,),
        in_specs=[
            pl.BlockSpec((nout, tile_m), lambda i: (0, i)),
            pl.BlockSpec((nout, 1), lambda i: (0, 0)),
            pl.BlockSpec((nout, 1), lambda i: (0, 0)),
        ],
        out_specs=pl.BlockSpec((nout, tile_m), lambda i: (0, i)),
        out_shape=jax.ShapeDtypeStruct((nout, Mp), jnp.float32),
        # independent tiles -> "parallel" (megacore sharding on v7x).
        compiler_params=pltpu.CompilerParams(dimension_semantics=("parallel",)),
        cost_estimate=pl.CostEstimate(flops=3 * nout * Mp, transcendentals=0,
                                      bytes_accessed=bytes_b),
    )(y, scale, shift)

    # ---- glue: (nout, Mp) -> NCHW --------------------------------------------
    out = out_t[:, :M].reshape(nout, N, Ho, Wo)
    return jnp.transpose(out, (1, 0, 2, 3))


def reference(x_nchw, conv_w, conv_b, gamma, beta):
    """Plain-JAX reference mirroring the PyTorch forward (training-mode BN)."""
    conv = lax.conv_general_dilated(
        x_nchw, conv_w, window_strides=(2, 2), padding=((1, 1), (1, 1)),
        dimension_numbers=("NCHW", "OIHW", "NCHW"),
    ) + conv_b[None, :, None, None]
    pool = lax.reduce_window(
        x_nchw, -jnp.inf, lax.max,
        window_dimensions=(1, 1, 2, 2), window_strides=(1, 1, 2, 2),
        padding="VALID",
    )
    y = jnp.concatenate([conv, pool], axis=1)
    mean = jnp.mean(y, axis=(0, 2, 3), keepdims=True)
    var = jnp.mean((y - mean) ** 2, axis=(0, 2, 3), keepdims=True)
    y_hat = (y - mean) * lax.rsqrt(var + BN_EPS)
    out = y_hat * gamma[None, :, None, None] + beta[None, :, None, None]
    return jnp.maximum(out, 0.0)


if __name__ == "__main__":
    # DownsamplerBlock(ninput=4, noutput=16): conv has 12 out-channels.
    N, Cin, H, W = 2, 4, 16, 16
    noutput = 16
    Cout = noutput - Cin

    key = jax.random.PRNGKey(0)
    k1, k2, k3, k4, k5 = jax.random.split(key, 5)
    x = jax.random.normal(k1, (N, Cin, H, W), jnp.float32)
    conv_w = 0.1 * jax.random.normal(k2, (Cout, Cin, 3, 3), jnp.float32)
    conv_b = 0.1 * jax.random.normal(k3, (Cout,), jnp.float32)
    gamma = 1.0 + 0.1 * jax.random.normal(k4, (noutput,), jnp.float32)
    beta = 0.1 * jax.random.normal(k5, (noutput,), jnp.float32)

    fwd = jax.jit(downsampler_block)
    out = jax.block_until_ready(fwd(x, conv_w, conv_b, gamma, beta))
    assert out.shape == (N, noutput, H // 2, W // 2), out.shape

    # Tight check vs the same forward evaluated on bf16-rounded conv/pool
    # inputs (isolates kernel structure from the intentional bf16 feed).
    x_r = x.astype(jnp.bfloat16).astype(jnp.float32)
    w_r = conv_w.astype(jnp.bfloat16).astype(jnp.float32)
    ref_tight = reference(x_r, w_r, conv_b, gamma, beta)
    if not bool(jnp.allclose(out, ref_tight, atol=2e-3, rtol=2e-3)):
        raise AssertionError("Pallas kernel does not match bf16-rounded reference")

    # Loose check vs the full-f32 PyTorch-equivalent forward (bf16 MXU inputs
    # introduce <~2e-2 deviation on this unit-variance output).
    ref_f32 = reference(x, conv_w, conv_b, gamma, beta)
    if not bool(jnp.allclose(out, ref_f32, atol=5e-2, rtol=5e-2)):
        raise AssertionError("Pallas kernel does not match f32 reference")

    print("KERNEL_OK")
</pallas_src>

<mosaic_0001>
module attributes {stable_mosaic.version = 11 : i64} {
  func.func @_conv_pool_stats_kernel(%arg0: i32, %arg1: memref<36x128xbf16, #tpu.memory_space<vmem>>, %arg2: memref<12x36xbf16, #tpu.memory_space<vmem>>, %arg3: memref<12x1xf32, #tpu.memory_space<vmem>>, %arg4: memref<16x128xf32, #tpu.memory_space<vmem>>, %arg5: memref<16x2xf32, #tpu.memory_space<vmem>>) attributes {dimension_semantics = [#tpu.dimension_semantics<arbitrary>], iteration_bounds = array<i64: 1>, scalar_prefetch = 0 : i64, scratch_operands = 0 : i64, tpu.core_type = #tpu.core_type<tc>, window_params = [{transform_indices = @transform_0, window_bounds = array<i64: 36, 128>}, {pipeline_mode = #tpu.pipeline_mode<synchronous>, transform_indices = @transform_1, window_bounds = array<i64: 12, 36>}, {pipeline_mode = #tpu.pipeline_mode<synchronous>, transform_indices = @transform_2, window_bounds = array<i64: 12, 1>}, {transform_indices = @transform_3, window_bounds = array<i64: 16, 128>}, {pipeline_mode = #tpu.pipeline_mode<synchronous>, transform_indices = @transform_4, window_bounds = array<i64: 16, 2>}]} {
    %c0_i32 = arith.constant 0 : i32
    %0 = arith.cmpi eq, %arg0, %c0_i32 : i32
    %1 = arith.extui %0 : i1 to i32
    %c0_i32_0 = arith.constant 0 : i32
    %2 = arith.cmpi ne, %1, %c0_i32_0 : i32
    scf.if %2 {
      %cst_29 = arith.constant 0.000000e+00 : f32
      %53 = vector.broadcast %cst_29 : f32 to vector<16x2xf32>
      %c0_30 = arith.constant 0 : index
      %c0_31 = arith.constant 0 : index
      %54 = vector.load %arg5[%c0_30, %c0_31] : memref<16x2xf32, #tpu.memory_space<vmem>>, vector<16x2xf32>
      tpu.vector_store %arg5[%c0_30, %c0_31], %53 {strides = array<i32>} : memref<16x2xf32, #tpu.memory_space<vmem>>, vector<16x2xf32>,
    } else {
    }
    %c0 = arith.constant 0 : index
    %c0_1 = arith.constant 0 : index
    %3 = vector.load %arg1[%c0, %c0_1] : memref<36x128xbf16, #tpu.memory_space<vmem>>, vector<36x128xbf16>
    %c0_2 = arith.constant 0 : index
    %c0_3 = arith.constant 0 : index
    %4 = vector.load %arg2[%c0_2, %c0_3] : memref<12x36xbf16, #tpu.memory_space<vmem>>, vector<12x36xbf16>
    %cst = arith.constant dense<0.000000e+00> : vector<12x128xf32>
    %5 = tpu.matmul %4, %3, %cst {dimension_numbers = #tpu.dot_dimension_numbers<[1], [0], [0], [1], [0, 0, 1, 1], [], []>} : vector<12x36xbf16>, vector<36x128xbf16>, vector<12x128xf32> -> vector<12x128xf32>
    %c0_4 = arith.constant 0 : index
    %c0_5 = arith.constant 0 : index
    %6 = vector.load %arg3[%c0_4, %c0_5] : memref<12x1xf32, #tpu.memory_space<vmem>>, vector<12x1xf32>
    %7 = vector.broadcast %6 : vector<12x1xf32> to vector<12x128xf32>
    %8 = arith.addf %5, %7 : vector<12x128xf32>
    %9 = vector.extract_strided_slice %3 {offsets = [0, 0], sizes = [4, 128], strides = [1, 1]} : vector<36x128xbf16> to vector<4x128xbf16>
    %10 = vector.extract_strided_slice %3 {offsets = [4, 0], sizes = [4, 128], strides = [1, 1]} : vector<36x128xbf16> to vector<4x128xbf16>
    %11 = arith.maximumf %9, %10 : vector<4x128xbf16>
    %12 = vector.extract_strided_slice %3 {offsets = [8, 0], sizes = [4, 128], strides = [1, 1]} : vector<36x128xbf16> to vector<4x128xbf16>
    %13 = vector.extract_strided_slice %3 {offsets = [12, 0], sizes = [4, 128], strides = [1, 1]} : vector<36x128xbf16> to vector<4x128xbf16>
    %14 = arith.maximumf %12, %13 : vector<4x128xbf16>
    %15 = arith.maximumf %11, %14 : vector<4x128xbf16>
    %16 = arith.extf %15 : vector<4x128xbf16> to vector<4x128xf32>
    %c0_6 = arith.constant 0 : index
    %c0_7 = arith.constant 0 : index
    %17 = vector.load %arg4[%c0_6, %c0_7] : memref<16x128xf32, #tpu.memory_space<vmem>>, vector<12x128xf32>
    tpu.vector_store %arg4[%c0_6, %c0_7], %8 {strides = array<i32>} : memref<16x128xf32, #tpu.memory_space<vmem>>, vector<12x128xf32>,
    %c12 = arith.constant 12 : index
    %c0_8 = arith.constant 0 : index
    %18 = vector.load %arg4[%c12, %c0_8] : memref<16x128xf32, #tpu.memory_space<vmem>>, vector<4x128xf32>
    tpu.vector_store %arg4[%c12, %c0_8], %16 {strides = array<i32>} : memref<16x128xf32, #tpu.memory_space<vmem>>, vector<4x128xf32>,
    %c128_i32 = arith.constant 128 : i32
    %19 = arith.muli %arg0, %c128_i32 : i32
    %20 = tpu.iota {dimensions = array<i32: 1>} : vector<1x128xi32>
    %21 = vector.broadcast %19 : i32 to vector<1x128xi32>
    %22 = arith.addi %21, %20 : vector<1x128xi32>
    %c128_i32_9 = arith.constant 128 : i32
    %23 = vector.broadcast %c128_i32_9 : i32 to vector<1x128xi32>
    %24 = arith.cmpi slt, %22, %23 : vector<1x128xi32>
    %25 = arith.extui %24 : vector<1x128xi1> to vector<1x128xi32>
    %26 = arith.sitofp %25 : vector<1x128xi32> to vector<1x128xf32>
    %27 = vector.broadcast %26 : vector<1x128xf32> to vector<12x128xf32>
    %28 = arith.mulf %8, %27 : vector<12x128xf32>
    %29 = vector.broadcast %26 : vector<1x128xf32> to vector<4x128xf32>
    %30 = arith.mulf %16, %29 : vector<4x128xf32>
    %c0_10 = arith.constant 0 : index
    %c0_11 = arith.constant 0 : index
    %31 = vector.load %arg5[%c0_10, %c0_11] : memref<16x2xf32, #tpu.memory_space<vmem>>, vector<12x1xf32>
    %cst_12 = arith.constant dense<0.000000e+00> : vector<12xf32>
    %32 = vector.multi_reduction <add>, %28, %cst_12 [1] : vector<12x128xf32> to vector<12xf32>
    %33 = vector.shape_cast %32 : vector<12xf32> to vector<12x1xf32>
    %34 = arith.addf %31, %33 : vector<12x1xf32>
    %c0_13 = arith.constant 0 : index
    %c0_14 = arith.constant 0 : index
    %35 = vector.load %arg5[%c0_13, %c0_14] : memref<16x2xf32, #tpu.memory_space<vmem>>, vector<12x1xf32>
    tpu.vector_store %arg5[%c0_13, %c0_14], %34 {strides = array<i32>} : memref<16x2xf32, #tpu.memory_space<vmem>>, vector<12x1xf32>,
    %c0_15 = arith.constant 0 : index
    %c1 = arith.constant 1 : index
    %36 = vector.load %arg5[%c0_15, %c1] : memref<16x2xf32, #tpu.memory_space<vmem>>, vector<12x1xf32>
    %37 = arith.mulf %28, %28 : vector<12x128xf32>
    %cst_16 = arith.constant dense<0.000000e+00> : vector<12xf32>
    %38 = vector.multi_reduction <add>, %37, %cst_16 [1] : vector<12x128xf32> to vector<12xf32>
    %39 = vector.shape_cast %38 : vector<12xf32> to vector<12x1xf32>
    %40 = arith.addf %36, %39 : vector<12x1xf32>
    %c0_17 = arith.constant 0 : index
    %c1_18 = arith.constant 1 : index
    %41 = vector.load %arg5[%c0_17, %c1_18] : memref<16x2xf32, #tpu.memory_space<vmem>>, vector<12x1xf32>
    tpu.vector_store %arg5[%c0_17, %c1_18], %40 {strides = array<i32>} : memref<16x2xf32, #tpu.memory_space<vmem>>, vector<12x1xf32>,
    %c12_19 = arith.constant 12 : index
    %c0_20 = arith.constant 0 : index
    %42 = vector.load %arg5[%c12_19, %c0_20] : memref<16x2xf32, #tpu.memory_space<vmem>>, vector<4x1xf32>
    %cst_21 = arith.constant dense<0.000000e+00> : vector<4xf32>
    %43 = vector.multi_reduction <add>, %30, %cst_21 [1] : vector<4x128xf32> to vector<4xf32>
    %44 = vector.shape_cast %43 : vector<4xf32> to vector<4x1xf32>
    %45 = arith.addf %42, %44 : vector<4x1xf32>
    %c12_22 = arith.constant 12 : index
    %c0_23 = arith.constant 0 : index
    %46 = vector.load %arg5[%c12_22, %c0_23] : memref<16x2xf32, #tpu.memory_space<vmem>>, vector<4x1xf32>
    tpu.vector_store %arg5[%c12_22, %c0_23], %45 {strides = array<i32>} : memref<16x2xf32, #tpu.memory_space<vmem>>, vector<4x1xf32>,
    %c12_24 = arith.constant 12 : index
    %c1_25 = arith.constant 1 : index
    %47 = vector.load %arg5[%c12_24, %c1_25] : memref<16x2xf32, #tpu.memory_space<vmem>>, vector<4x1xf32>
    %48 = arith.mulf %30, %30 : vector<4x128xf32>
    %cst_26 = arith.constant dense<0.000000e+00> : vector<4xf32>
    %49 = vector.multi_reduction <add>, %48, %cst_26 [1] : vector<4x128xf32> to vector<4xf32>
    %50 = vector.shape_cast %49 : vector<4xf32> to vector<4x1xf32>
    %51 = arith.addf %47, %50 : vector<4x1xf32>
    %c12_27 = arith.constant 12 : index
    %c1_28 = arith.constant 1 : index
    %52 = vector.load %arg5[%c12_27, %c1_28] : memref<16x2xf32, #tpu.memory_space<vmem>>, vector<4x1xf32>
    tpu.vector_store %arg5[%c12_27, %c1_28], %51 {strides = array<i32>} : memref<16x2xf32, #tpu.memory_space<vmem>>, vector<4x1xf32>,
    return
  }
  func.func @transform_0(%arg0: i32) -> (i32, i32) {
    %c0_i32 = arith.constant 0 : i32
    %c0_i32_0 = arith.constant 0 : i32
    return %c0_i32, %arg0 : i32, i32
  }
  func.func @transform_1(%arg0: i32) -> (i32, i32) {
    %c0_i32 = arith.constant 0 : i32
    %c0_i32_0 = arith.constant 0 : i32
    %c0_i32_1 = arith.constant 0 : i32
    return %c0_i32, %c0_i32_0 : i32, i32
  }
  func.func @transform_2(%arg0: i32) -> (i32, i32) {
    %c0_i32 = arith.constant 0 : i32
    %c0_i32_0 = arith.constant 0 : i32
    %c0_i32_1 = arith.constant 0 : i32
    return %c0_i32, %c0_i32_0 : i32, i32
  }
  func.func @transform_3(%arg0: i32) -> (i32, i32) {
    %c0_i32 = arith.constant 0 : i32
    %c0_i32_0 = arith.constant 0 : i32
    return %c0_i32, %arg0 : i32, i32
  }
  func.func @transform_4(%arg0: i32) -> (i32, i32) {
    %c0_i32 = arith.constant 0 : i32
    %c0_i32_0 = arith.constant 0 : i32
    %c0_i32_1 = arith.constant 0 : i32
    return %c0_i32, %c0_i32_0 : i32, i32
  }
}

module attributes {stable_mosaic.version = 11 : i64} {
  func.func @_bn_relu_kernel(%arg0: i32, %arg1: memref<16x128xf32, #tpu.memory_space<vmem>>, %arg2: memref<16x1xf32, #tpu.memory_space<vmem>>, %arg3: memref<16x1xf32, #tpu.memory_space<vmem>>, %arg4: memref<16x128xf32, #tpu.memory_space<vmem>>) attributes {dimension_semantics = [#tpu.dimension_semantics<parallel>], iteration_bounds = array<i64: 1>, scalar_prefetch = 0 : i64, scratch_operands = 0 : i64, tpu.core_type = #tpu.core_type<tc>, window_params = [{transform_indices = @transform_0, window_bounds = array<i64: 16, 128>}, {pipeline_mode = #tpu.pipeline_mode<synchronous>, transform_indices = @transform_1, window_bounds = array<i64: 16, 1>}, {pipeline_mode = #tpu.pipeline_mode<synchronous>, transform_indices = @transform_2, window_bounds = array<i64: 16, 1>}, {transform_indices = @transform_3, window_bounds = array<i64: 16, 128>}]} {
    %c0 = arith.constant 0 : index
    %c0_0 = arith.constant 0 : index
    %0 = vector.load %arg1[%c0, %c0_0] : memref<16x128xf32, #tpu.memory_space<vmem>>, vector<16x128xf32>
    %c0_1 = arith.constant 0 : index
    %c0_2 = arith.constant 0 : index
    %1 = vector.load %arg2[%c0_1, %c0_2] : memref<16x1xf32, #tpu.memory_space<vmem>>, vector<16x1xf32>
    %2 = vector.broadcast %1 : vector<16x1xf32> to vector<16x128xf32>
    %3 = arith.mulf %0, %2 : vector<16x128xf32>
    %c0_3 = arith.constant 0 : index
    %c0_4 = arith.constant 0 : index
    %4 = vector.load %arg3[%c0_3, %c0_4] : memref<16x1xf32, #tpu.memory_space<vmem>>, vector<16x1xf32>
    %5 = vector.broadcast %4 : vector<16x1xf32> to vector<16x128xf32>
    %6 = arith.addf %3, %5 : vector<16x128xf32>
    %cst = arith.constant 0.000000e+00 : f32
    %7 = vector.broadcast %cst : f32 to vector<16x128xf32>
    %8 = arith.maximumf %6, %7 : vector<16x128xf32>
    %c0_5 = arith.constant 0 : index
    %c0_6 = arith.constant 0 : index
    %9 = vector.load %arg4[%c0_5, %c0_6] : memref<16x128xf32, #tpu.memory_space<vmem>>, vector<16x128xf32>
    tpu.vector_store %arg4[%c0_5, %c0_6], %8 {strides = array<i32>} : memref<16x128xf32, #tpu.memory_space<vmem>>, vector<16x128xf32>,
    return
  }
  func.func @transform_0(%arg0: i32) -> (i32, i32) {
    %c0_i32 = arith.constant 0 : i32
    %c0_i32_0 = arith.constant 0 : i32
    return %c0_i32, %arg0 : i32, i32
  }
  func.func @transform_1(%arg0: i32) -> (i32, i32) {
    %c0_i32 = arith.constant 0 : i32
    %c0_i32_0 = arith.constant 0 : i32
    %c0_i32_1 = arith.constant 0 : i32
    return %c0_i32, %c0_i32_0 : i32, i32
  }
  func.func @transform_2(%arg0: i32) -> (i32, i32) {
    %c0_i32 = arith.constant 0 : i32
    %c0_i32_0 = arith.constant 0 : i32
    %c0_i32_1 = arith.constant 0 : i32
    return %c0_i32, %c0_i32_0 : i32, i32
  }
  func.func @transform_3(%arg0: i32) -> (i32, i32) {
    %c0_i32 = arith.constant 0 : i32
    %c0_i32_0 = arith.constant 0 : i32
    return %c0_i32, %arg0 : i32, i32
  }
}

</mosaic_0001>

<llo_original>
// kernel: downsampler_block.3
$region0: #{downsampler_block.3}
  #allocation0 [shape = 'u32[]', space=smem, size = 0x4, offset = 0x4, fixed_abs, tag = 'smem constant byte address 0x4 - core index']
  #allocation1 [shape = 'u32[144,128]{1,0:T(1,128)}', space=vmem, size = 0x12000, scoped, tag = 'internal scratch']
  %s0 = inlined_call_operand.vmem [shape: f32[16,128], index: 0, kind: input, shape index: {}]
  %s1 = inlined_call_operand.vmem [shape: f32[16,1], index: 1, kind: input, shape index: {}]
  %s2 = inlined_call_operand.vmem [shape: f32[16,1], index: 2, kind: input, shape index: {}]
  %s3 = inlined_call_operand.vmem [shape: f32[16,128], index: 3, kind: output, shape index: {}]
  %s4 = sld [smem:[#allocation0]]
  $region22: #{downsampler_block.3} parent=0
    _
  %s6 = ssub.s32 1, %s4
  %s7 = scalar_select 0, %s6, %s4
  // Predicated region
  $region2: #{downsampler_block.3} parent=0 // pred_check
    _
  $region3: #{downsampler_block.3} parent=0 // pred_check_branch
    %9 = sbr.rel (0) target = $region5
  $region4: #{downsampler_block.3} parent=0 // pred_region
    _
  $region5: #{downsampler_block.3} parent=0 // pred_fallthru
    _
  // Predicated region
  $region6: #{downsampler_block.3} parent=0 // pred_check
    _
  $region7: #{downsampler_block.3} parent=0 // pred_check_branch
    %11 = sbr.rel (0) target = $region9
  $region8: #{downsampler_block.3} parent=0 // pred_region
    _
  $region9: #{downsampler_block.3} parent=0 // pred_fallthru
    _
  // Predicated region
  $region10: #{downsampler_block.3} parent=0 // pred_check
    _
  $region11: #{downsampler_block.3} parent=0 // pred_check_branch
    %13 = sbr.rel (0) target = $region13
  $region12: #{downsampler_block.3} parent=0 // pred_region
    _
  $region13: #{downsampler_block.3} parent=0 // pred_fallthru
    _
  %v14 = vld [vmem:[%s0] sm:$0xff]
  %v15 = vld [vmem:[%s0 + $0x8] sm:$0xff]
  %v16 = vld [vmem:[%s1] sm:$0xff]
  %v17 = vld [vmem:[%s1 + $0x8] sm:$0xff]
  %19 = vset.pattern.permute.xlu0 0
  %20 = vperm.xlu0 %19, %v16
  %v21 = vpop.permute.xlu0 %20
  %24 = vset.pattern.permute.xlu0 0
  %25 = vperm.xlu0 %24, %v17
  %v26 = vpop.permute.xlu0 %25
  %v28 = vmul.f32 %v14, %v21
  %v29 = vmul.f32 %v15, %v26
  %v30 = vld [vmem:[%s2] sm:$0xff]
  %v31 = vld [vmem:[%s2 + $0x8] sm:$0xff]
  %33 = vset.pattern.permute.xlu0 0
  %34 = vperm.xlu0 %33, %v30
  %v35 = vpop.permute.xlu0 %34
  %38 = vset.pattern.permute.xlu0 0
  %39 = vperm.xlu0 %38, %v31
  %v40 = vpop.permute.xlu0 %39
  %v42 = vadd.f32 %v28, %v35
  %v43 = vadd.f32 %v29, %v40
  %v44 = vmax.f32 %v42, 0.0
  %v45 = vmax.f32 %v43, 0.0
  %46 = vst [vmem:[%s3] sm:$0xff] %v44
  %47 = vst [vmem:[%s3 + $0x8] sm:$0xff] %v45
  // Predicated region
  $region14: #{downsampler_block.3} parent=0 // pred_check
    _
  $region15: #{downsampler_block.3} parent=0 // pred_check_branch
    %49 = sbr.rel (0) target = $region17
  $region16: #{downsampler_block.3} parent=0 // pred_region
    _
  $region17: #{downsampler_block.3} parent=0 // pred_fallthru
    _
  // Predicated region
  $region18: #{downsampler_block.3} parent=0 // pred_check
    _
  $region19: #{downsampler_block.3} parent=0 // pred_check_branch
    %51 = sbr.rel (0) target = $region21
  $region20: #{downsampler_block.3} parent=0 // pred_region
    _
  $region21: #{downsampler_block.3} parent=0 // pred_fallthru
    _

// kernel: downsampler_block.2
$region0: #{downsampler_block.2}
  #allocation0 [shape = 'u32[]', space=smem, size = 0x4, offset = 0x4, fixed_abs, tag = 'smem constant byte address 0x4 - core index']
  #allocation1 [shape = 'u32[144,128]{1,0:T(1,128)}', space=vmem, size = 0x12000, scoped, tag = 'internal scratch']
  %s0 = inlined_call_operand.vmem [shape: bf16[36,128], index: 0, kind: input, shape index: {}]
  %s1 = inlined_call_operand.vmem [shape: bf16[12,36], index: 1, kind: input, shape index: {}]
  %s2 = inlined_call_operand.vmem [shape: f32[12,1], index: 2, kind: input, shape index: {}]
  %s3 = inlined_call_operand.vmem [shape: f32[16,128], index: 3, kind: output, shape index: {0}]
  %s4 = inlined_call_operand.vmem [shape: f32[16,2], index: 4, kind: output, shape index: {1}]
  %5 = xla_tuple %s3, %s4
  %s6 = sld [smem:[#allocation0]]
  $region34: #{downsampler_block.2} parent=0
    _
  %s8 = ssub.s32 1, %s6
  %s9 = scalar_select 0, %s8, %s6
  // Predicated region
  $region2: #{downsampler_block.2} parent=0 // pred_check
    _
  $region3: #{downsampler_block.2} parent=0 // pred_check_branch
    %11 = sbr.rel (0) target = $region5
  $region4: #{downsampler_block.2} parent=0 // pred_region
    _
  $region5: #{downsampler_block.2} parent=0 // pred_fallthru
    _
  // Predicated region
  $region6: #{downsampler_block.2} parent=0 // pred_check
    _
  $region7: #{downsampler_block.2} parent=0 // pred_check_branch
    %13 = sbr.rel (0) target = $region9
  $region8: #{downsampler_block.2} parent=0 // pred_region
    _
  $region9: #{downsampler_block.2} parent=0 // pred_fallthru
    _
  // Predicated region
  $region10: #{downsampler_block.2} parent=0 // pred_check
    _
  $region11: #{downsampler_block.2} parent=0 // pred_check_branch
    %15 = sbr.rel (0) target = $region13
  $region12: #{downsampler_block.2} parent=0 // pred_region
    _
  $region13: #{downsampler_block.2} parent=0 // pred_fallthru
    _
  %p17 = scmp.eq.s32.totalorder 0, 0
  // Predicated region
  $region14: #{downsampler_block.2} parent=0 // pred_check
    %p18 = pneg %p17
  $region15: #{downsampler_block.2} parent=0 // pred_check_branch
    %20 = sbr.rel (%p18) target = $region17
  $region16: #{downsampler_block.2} parent=0 // pred_region
    %vm21 = vcmask 15360
    %22 = vst.msk [vmem:[%s4] sm:$0xff] %vm21, 0.0
    %23 = vst.msk [vmem:[%s4 + $0x8] sm:$0xff] %vm21, 0.0
  $region17: #{downsampler_block.2} parent=0 // pred_fallthru
    _
  %v24 = vld [vmem:[%s0] sm:$0xf]
  %v25 = vld [vmem:[%s0 + $0x4] sm:$0xf]
  %v26 = vld [vmem:[%s0 + $0x8] sm:$0xf]
  %v27 = vld [vmem:[%s0 + $0xc] sm:$0xf]
  %v28 = vld [vmem:[%s0 + $0x10] sm:$0x3]
  %v29 = vld [vmem:[%s1] sm:$0xf]
  %v30 = vld [vmem:[%s1 + $0x4] sm:$0x3]
  %v31 = vld [vmem:[%s2] sm:$0xff]
  %v32 = vld [vmem:[%s2 + $0x8] sm:$0xf]
  %34 = vset.pattern.permute.xlu0 0
  %35 = vperm.xlu0 %34, %v31
  %v36 = vpop.permute.xlu0 %35
  %39 = vset.pattern.permute.xlu0 0
  %40 = vperm.xlu0 %39, %v32
  %v41 = vpop.permute.xlu0 %40
  %v45 = vunpack.c.l.b16 %v29
  %v46 = vunpack.c.l.b16 %v30
  %v47 = vpack.c.b16 %v46, %v45
  %v53 = vunpack.c.l.b16 %v24
  %v54 = vunpack.c.l.b16 %v25
  %v55 = vunpack.c.l.b16 %v26
  %v56 = vunpack.c.l.b16 %v27
  %v57 = vunpack.c.l.b16 %v28
  %v58 = vpack.c.b16 %v54, %v53
  %v59 = vpack.c.b16 %v56, %v55
  %v60 = vpack.c.b16 %v57, %v57
  %vm63 = vcmask 293888
  %v65 = vsel %vm63, %v47, 0
  %vm67 = vcmask 1041408
  %v69 = vsel %vm67, %v60, 0
  %71 = vmatprep.subr.bf16.mxu0 0
  %72 = vmatpush1.bf16.msra.mxu0 0
  %73 = vmatprep.subr.bf16.mxu0 0
  %74 = vmatpush1.bf16.msra.mxu0 0
  %75 = vmatprep.subr.bf16.mxu0 0
  %76 = vmatpush1.bf16.msra.mxu0 0
  %77 = vmatprep.subr.bf16.mxu0 0
  %78 = vmatpush1.bf16.msra.mxu0 0
  %79 = vmatprep.subr.bf16.mxu0 0
  %80 = vmatpush1.bf16.msra.mxu0 0
  %81 = vmatprep.subr.bf16.mxu0 0
  %82 = vmatpush1.bf16.msra.mxu0 %v69
  %83 = vmatprep.subr.bf16.mxu0 0
  %84 = vmatpush1.bf16.msra.mxu0 %v59
  %85 = vmatprep.subr.bf16.mxu0 0
  %86 = vmatpush1.bf16.msra.mxu0 %v58
  %87 = vmatprep.subr.bf16.mxu0 0
  %88 = vmatpush2.bf16.msra.mxu0 0
  %89 = vmatprep.subr.bf16.mxu0 0
  %90 = vmatpush2.bf16.msra.mxu0 0
  %91 = vmatprep.subr.bf16.mxu0 0
  %92 = vmatpush2.bf16.msra.mxu0 0
  %93 = vmatprep.subr.bf16.mxu0 0
  %94 = vmatpush2.bf16.msra.mxu0 0
  %95 = vmatprep.subr.bf16.mxu0 0
  %96 = vmatpush2.bf16.msra.mxu0 0
  %97 = vmatprep.subr.bf16.mxu0 0
  %98 = vmatpush2.bf16.msra.mxu0 0
  %99 = vmatprep.subr.bf16.mxu0 0
  %100 = vmatpush2.bf16.msra.mxu0 0
  %101 = vmatprep.subr.bf16.mxu0 0
  %102 = vmatpush2.bf16.msra.mxu0 0
  %103 = vmatprep.mubr.bf16.mxu0 0
  %104 = vmatmul.mubr.bf16.gmra.mxu0 %v65
  %v105 = vpop.f32.mrf.mxu0
  %v106 = vadd.f32 %v36, %v105
  %v107 = vpop.f32.mrf.mxu0
  %v108 = vpop.f32.mrf.mxu0
  %v109 = vadd.f32 %v41, %v108
  %v110 = vpop.f32.mrf.mxu0
  %111 = vdwg.mxu0
  %v112 = vrot.slane %v24, 6
  %v113 = vrot.slane %v112, 4
  %v115 = vmax.bf16 %v24, %v113
  %v116 = vrot.slane %v25, 6
  %v117 = vrot.slane %v116, 4
  %v119 = vmax.bf16 %v25, %v117
  %v120 = vmax.bf16 %v115, %v119
  %v121 = vunpack.c.l.bf16 %v120
  %122 = vst [vmem:[%s3] sm:$0xff] %v106
  %123 = vst [vmem:[%s3 + $0x8] sm:$0xf] %v109
  %124 = vst [vmem:[%s3 + $0xc] sm:$0xf] %v121
  %s125 = smul.u32 0, 128
  %v126 = vlaneseq
  %v127 = vand.u32 %v126, 127
  %v128 = vstv %s125
  %v129 = vadd.s32 %v128, %v127
  %vm130 = vcmp.lt.s32.totalorder %v129, 128
  %v131 = vsel %vm130, 1, 0
  %v132 = vcvt.s32.f32 %v131
  %v133 = vmul.f32 %v106, %v132
  %v134 = vmul.f32 %v109, %v132
  %v135 = vmul.f32 %v121, %v132
  %v136 = vld [vmem:[%s4] sm:$0xff]
  %v137 = vld [vmem:[%s4 + $0x8] sm:$0xf]
  %138 = vadd.xlane.f32.xlu0 %v133
  %v139 = vpop.xlane.xlu0 %138
  %vm140 = vcmask 1043456
  %v141 = vsel %vm140, %v134, 0.0
  %142 = vadd.xlane.f32.xlu0 %v141
  %v143 = vpop.xlane.xlu0 %142
  %v144 = vadd.f32 %v136, %v139
  %v145 = vadd.f32 %v137, %v143
  %vm146 = vcmask 7168
  %147 = vst.msk [vmem:[%s4] sm:$0xff] %vm146, %v144
  %vm148 = vcmask 3072
  %149 = vst.msk [vmem:[%s4 + $0x8] sm:$0xf] %vm148, %v145
  %v150 = vld [vmem:[%s4] sm:$0xff]
  %v151 = vld [vmem:[%s4 + $0x8] sm:$0xf]
  %v152 = vmul.f32 %v133, %v133
  %v153 = vmul.f32 %v134, %v134
  %154 = vadd.xlane.f32.xlu0 %v152
  %v155 = vpop.xlane.xlu0 %154
  %v156 = vsel %vm140, %v153, 0.0
  %157 = vadd.xlane.f32.xlu0 %v156
  %v158 = vpop.xlane.xlu0 %157
  %v159 = vadd.f32 %v150, %v155
  %v160 = vadd.f32 %v151, %v158
  %vm161 = vcmask 15368
  %162 = vst.msk [vmem:[%s4] sm:$0xff] %vm161, %v159
  %vm163 = vcmask 11272
  %164 = vst.msk [vmem:[%s4 + $0x8] sm:$0xf] %vm163, %v160
  %v165 = vld [vmem:[%s4 + $0xc] sm:$0xf]
  %v166 = vsel %vm140, %v135, 0.0
  %167 = vadd.xlane.f32.xlu0 %v166
  %v168 = vpop.xlane.xlu0 %167
  %v169 = vadd.f32 %v165, %v168
  %170 = vst.msk [vmem:[%s4 + $0xc] sm:$0xf] %vm148, %v169
  %v171 = vld [vmem:[%s4 + $0xc] sm:$0xf]
  %v172 = vmul.f32 %v135, %v135
  %v173 = vsel %vm140, %v172, 0.0
  %174 = vadd.xlane.f32.xlu0 %v173
  %v175 = vpop.xlane.xlu0 %174
  %v176 = vadd.f32 %v171, %v175
  %177 = vst.msk [vmem:[%s4 + $0xc] sm:$0xf] %vm163, %v176
  // Predicated region
  $region18: #{downsampler_block.2} parent=0 // pred_check
    _
  $region19: #{downsampler_block.2} parent=0 // pred_check_branch
    %179 = sbr.rel (0) target = $region21
  $region20: #{downsampler_block.2} parent=0 // pred_region
    _
  $region21: #{downsampler_block.2} parent=0 // pred_fallthru
    _
  // Predicated region
  $region22: #{downsampler_block.2} parent=0 // pred_check
    _
  $region23: #{downsampler_block.2} parent=0 // pred_check_branch
    %181 = sbr.rel (0) target = $region25
  $region24: #{downsampler_block.2} parent=0 // pred_region
    _
  $region25: #{downsampler_block.2} parent=0 // pred_fallthru
    _
  // Predicated region
  $region26: #{downsampler_block.2} parent=0 // pred_check
    _
  $region27: #{downsampler_block.2} parent=0 // pred_check_branch
    %183 = sbr.rel (0) target = $region29
  $region28: #{downsampler_block.2} parent=0 // pred_region
    _
  $region29: #{downsampler_block.2} parent=0 // pred_fallthru
    _
  // Predicated region
  $region30: #{downsampler_block.2} parent=0 // pred_check
    _
  $region31: #{downsampler_block.2} parent=0 // pred_check_branch
    %185 = sbr.rel (0) target = $region33
  $region32: #{downsampler_block.2} parent=0 // pred_region
    _
  $region33: #{downsampler_block.2} parent=0 // pred_fallthru
    _

</llo_original>
